<compile_context>
chip_gen: v7x
topology: tpu7x:2x2x1
jax: 0.10.0
libtpu: 0.0.40
codegen_flags: <defaults>
</compile_context>

<pallas_src>
import numpy as np
import jax
import jax.numpy as jnp
from jax.experimental import pallas as pl
from jax.experimental.pallas import tpu as pltpu

# ---------------- sizes ----------------
B = 8            # batch
S = 8            # src_len
EMB = 32         # emb_dim
ENC_HID = 64     # enc_hid_dim  -> encoder outputs have 2*ENC_HID features
E2 = 2 * ENC_HID # 128
H = 32           # dec_hid_dim
OUT = 128        # output_dim (vocab projection)
VOCAB = 128      # embedding rows
N_LAYERS = 1     # forced by `assert (output == hidden).all()`

G3 = 3 * H                 # 96   (GRU gates r|z|n)
ACT_K = H + VOCAB          # 160  (MM1 K dim: [hidden | one-hot])
ACT_N = H + G3 + OUT + G3  # 352  (MM1 N dim: hid_proj | gh | fc_emb | gate_emb)
CTX_N = OUT + G3 + H       # 256  (MM2 N dim: fc_ctx | gate_ctx | attn_ctx)
PACK = 256                 # packed output slab width


# ---------------- Pallas kernel (single decode step) ----------------
def decoder_step_kernel(ids_ref, hid_ref, enc_ref, amask_ref,
                        wbig_ref, wctx_ref, wfo_ref, bias_ref, out_ref):
    hidden = hid_ref[...]                                        # (B, H) f32

    # --- in-kernel embedding gather: one-hot rows (feed the MXU anyway) ---
    lane = jax.lax.broadcasted_iota(jnp.int32, (1, VOCAB), 1)
    rows = [(lane == ids_ref[i]).astype(jnp.float32) for i in range(B)]
    onehot = jnp.concatenate(rows, axis=0)                       # (B, VOCAB) f32
    act_in = jnp.concatenate(
        [hidden.astype(jnp.bfloat16), onehot.astype(jnp.bfloat16)], axis=1)  # (B, ACT_K)

    # --- MM1: block-diag fused [hidden | onehot] projection ---
    act = jnp.dot(act_in, wbig_ref[...], preferred_element_type=jnp.float32)  # (B, ACT_N)
    hid_proj = act[:, :H]              # (B, H)    attention hidden projection
    gh = act[:, H:H + G3]              # (B, 3H)   GRU hidden gates (no bias)
    ge_all = act[:, H + G3:]           # (B, OUT+3H) = [fc_emb(0:128) | gate_emb(128:224)]

    # --- MM2: context projection hoisted ahead of softmax ---
    # ctx columns: [fc_ctx(0:OUT) | gate_ctx(OUT:OUT+3H) | attn_ctx(OUT+3H:)]
    ctx = jnp.dot(enc_ref[...], wctx_ref[...],
                  preferred_element_type=jnp.float32)            # (S*B, CTX_N) f32

    b_attn = bias_ref[0:1, :H]
    v_vec = bias_ref[0:1, H:2 * H]
    b_hn = bias_ref[0:1, 2 * H:3 * H]
    b_g = bias_ref[1:2, :G3]
    b_fc = bias_ref[2:3, :OUT]

    # --- Bahdanau attention, computed directly in (B, S) orientation (no transposes) ---
    score_cols = []
    for s in range(S):
        ctx_s = ctx[s * B:(s + 1) * B, :]                        # (B, CTX_N) static slice
        e_s = jnp.tanh(ctx_s[:, OUT + G3:] + hid_proj + b_attn)  # (B, H)
        score_cols.append(jnp.sum(e_s * v_vec, axis=1, keepdims=True))  # (B, 1)
    score = jnp.concatenate(score_cols, axis=1) + amask_ref[...]        # (B, S), f32
    score = score - jnp.max(score, axis=1, keepdims=True)
    unnorm = jnp.exp(score)
    attn_bs = unnorm / jnp.sum(unnorm, axis=1, keepdims=True)           # (B, S)

    # --- weighted context folded through the projection: attn @ (enc @ W) ---
    gw = jnp.zeros((B, OUT + G3), jnp.float32)
    for s in range(S):
        gw = gw + attn_bs[:, s:s + 1] * ctx[s * B:(s + 1) * B, :OUT + G3]
    combined = ge_all + gw             # (B, OUT+3H) = [fc contributions | gate contributions]

    # --- single-layer GRU cell (PyTorch gate order r, z, n) ---
    gi = combined[:, OUT:] + b_g                                 # (B, 3H)
    r = jax.nn.sigmoid(gi[:, :H] + gh[:, :H])
    z = jax.nn.sigmoid(gi[:, H:2 * H] + gh[:, H:2 * H])
    n = jnp.tanh(gi[:, 2 * H:] + r * (gh[:, 2 * H:] + b_hn))
    h_new = (1.0 - z) * n + z * hidden                           # (B, H) == output

    # --- MM3: fc_out = h_new @ W_fc_hid + (embedded + weighted fc contributions) + b_fc ---
    pred = (jnp.dot(h_new.astype(jnp.bfloat16), wfo_ref[...],
                    preferred_element_type=jnp.float32)
            + combined[:, :OUT] + b_fc)                          # (B, OUT)

    # --- packed lane-dense output slab: [pred | h_new | attn | pad] ---
    pad = jnp.zeros((B, PACK - OUT - H - S), jnp.float32)
    out_ref[...] = jnp.concatenate([pred, h_new, attn_bs, pad], axis=1)


# ---------------- one-time weight preprocessing (outside the step path) ----------------
def prepare_weights(p):
    emb = p["embedding"].astype(jnp.float32)                    # (VOCAB, EMB)

    W_a = p["W_attn"]                                            # (H, H + E2); input = [hidden ; enc]
    wah = W_a[:, :H].T                                           # (H, H)
    wae = W_a[:, H:].T                                           # (E2, H)

    W_ih, W_hh = p["W_ih"], p["W_hh"]
    b_ih, b_hh = p["b_ih"], p["b_hh"]
    wg_e = W_ih[:, :EMB].T                                       # (EMB, 3H)
    wg_w = W_ih[:, EMB:].T                                       # (E2, 3H)
    wg_h = W_hh.T                                                # (H, 3H)

    W_fc = p["W_fc"]                                             # (OUT, H + E2 + EMB); input = [output ; weighted ; embedded]
    wfo = W_fc[:, :H].T                                          # (H, OUT)
    wfw = W_fc[:, H:H + E2].T                                    # (E2, OUT)
    wfe = W_fc[:, H + E2:].T                                     # (EMB, OUT)

    # fold the embedding table into the embedded-input weights (exact: one-hot row select)
    emb_gate = emb @ wg_e                                        # (VOCAB, 3H)
    emb_fc = emb @ wfe                                           # (VOCAB, OUT)

    # MM1 block-diag slab: rows [hidden(H); one-hot(VOCAB)],
    # cols [hid_proj(H) | gh(3H) | fc_emb(OUT) | gate_emb(3H)]
    top = jnp.concatenate([wah, wg_h, jnp.zeros((H, OUT + G3), jnp.float32)], axis=1)
    bot = jnp.concatenate([jnp.zeros((VOCAB, H + G3), jnp.float32), emb_fc, emb_gate], axis=1)
    w_big = jnp.concatenate([top, bot], axis=0).astype(jnp.bfloat16)    # (ACT_K, ACT_N)

    # MM2 context slab: cols [fc_ctx(OUT) | gate_ctx(3H) | attn_ctx(H)]
    w_ctx = jnp.concatenate([wfw, wg_w, wae], axis=1).astype(jnp.bfloat16)  # (E2, CTX_N)

    w_fo = wfo.astype(jnp.bfloat16)                              # (H, OUT)

    # biases packed into one (3, 128) f32 slab
    b_g = jnp.concatenate([b_ih[:H] + b_hh[:H],
                           b_ih[H:2 * H] + b_hh[H:2 * H],
                           b_ih[2 * H:3 * H]])                   # (3H,)  (b_hn stays separate)
    row0 = jnp.concatenate([p["b_attn"], p["v_attn"][0], b_hh[2 * H:3 * H],
                            jnp.zeros((128 - 3 * H,), jnp.float32)])
    row1 = jnp.concatenate([b_g, jnp.zeros((128 - G3,), jnp.float32)])
    row2 = p["b_fc"]
    bias = jnp.stack([row0, row1, row2], axis=0).astype(jnp.float32)    # (3, 128)

    return dict(w_big=w_big, w_ctx=w_ctx, w_fo=w_fo, bias=bias)


# ---------------- once-per-source-sequence prep (loop-invariant across decode steps) ----
def prepare_sequence(encoder_outputs, mask):
    enc_flat = encoder_outputs.reshape(S * B, E2).astype(jnp.bfloat16)  # (S*B, E2) bf16
    addmask = jnp.where(mask == 0.0, -1e10, 0.0).astype(jnp.float32)    # (B, S) additive mask
    return enc_flat, addmask


# ---------------- per-step wrapper (one pallas_call, slicing only) ----------------
def decoder_pallas(text, hidden, enc_flat, addmask, prep):
    smem = pl.BlockSpec(memory_space=pltpu.MemorySpace.SMEM)
    vmem = pl.BlockSpec(memory_space=pltpu.MemorySpace.VMEM)
    out = pl.pallas_call(
        decoder_step_kernel,
        out_shape=jax.ShapeDtypeStruct((B, PACK), jnp.float32),
        in_specs=[smem, vmem, vmem, vmem, vmem, vmem, vmem, vmem],
        out_specs=vmem,
    )(text, hidden, enc_flat, addmask,
      prep["w_big"], prep["w_ctx"], prep["w_fo"], prep["bias"])
    pred = out[:, :OUT]
    h_new = out[:, OUT:OUT + H]
    attn = out[:, OUT + H:OUT + H + S]
    # matches PyTorch return: (prediction, hidden.squeeze(0), attn.squeeze(1))
    return pred, h_new, attn


# ---------------- float64 numpy reference (mirrors the PyTorch forward) ----------------
def decoder_reference(text, hidden, encoder_outputs, mask, p):
    f = lambda x: np.asarray(x, dtype=np.float64)
    emb_tbl, W_attn, b_attn = f(p["embedding"]), f(p["W_attn"]), f(p["b_attn"])
    v_attn, W_ih, W_hh = f(p["v_attn"]), f(p["W_ih"]), f(p["W_hh"])
    b_ih, b_hh, W_fc, b_fc = f(p["b_ih"]), f(p["b_hh"]), f(p["W_fc"]), f(p["b_fc"])
    hidden, enc, mask = f(hidden), f(encoder_outputs), f(mask)
    text = np.asarray(text)

    embedded = emb_tbl[text]                                         # (B, EMB)
    enc_p = np.transpose(enc, (1, 0, 2))                             # (B, S, E2)
    hid_rep = np.repeat(hidden[:, None, :], S, axis=1)               # (B, S, H)
    energy = np.tanh(np.concatenate([hid_rep, enc_p], -1) @ W_attn.T + b_attn)
    score = (energy @ v_attn.T)[..., 0]                              # (B, S)
    score = np.where(mask == 0.0, -1e10, score)
    score = score - score.max(axis=1, keepdims=True)
    e = np.exp(score)
    attn = e / e.sum(axis=1, keepdims=True)
    weighted = np.einsum("bs,bse->be", attn, enc_p)                  # (B, E2)
    rnn_in = np.concatenate([embedded, weighted], axis=1)            # (B, EMB+E2)
    gi = rnn_in @ W_ih.T + b_ih
    gh = hidden @ W_hh.T + b_hh
    sig = lambda x: 1.0 / (1.0 + np.exp(-x))
    r = sig(gi[:, :H] + gh[:, :H])
    z = sig(gi[:, H:2 * H] + gh[:, H:2 * H])
    n = np.tanh(gi[:, 2 * H:] + r * gh[:, 2 * H:])
    h_new = (1.0 - z) * n + z * hidden
    pred = np.concatenate([h_new, weighted, embedded], axis=1) @ W_fc.T + b_fc
    return pred, h_new, attn


# ---------------- deterministic parameter init ----------------
def init_params(key):
    ks = jax.random.split(key, 10)
    s = 0.05
    return dict(
        embedding=jax.random.normal(ks[0], (VOCAB, EMB), jnp.float32),
        W_attn=s * jax.random.normal(ks[1], (H, H + E2), jnp.float32),
        b_attn=s * jax.random.normal(ks[2], (H,), jnp.float32),
        v_attn=s * jax.random.normal(ks[3], (1, H), jnp.float32),
        W_ih=s * jax.random.normal(ks[4], (3 * H, EMB + E2), jnp.float32),
        W_hh=s * jax.random.normal(ks[5], (3 * H, H), jnp.float32),
        b_ih=s * jax.random.normal(ks[6], (3 * H,), jnp.float32),
        b_hh=s * jax.random.normal(ks[7], (3 * H,), jnp.float32),
        W_fc=s * jax.random.normal(ks[8], (OUT, H + E2 + EMB), jnp.float32),
        b_fc=s * jax.random.normal(ks[9], (OUT,), jnp.float32),
    )


if __name__ == "__main__":
    root = jax.random.PRNGKey(0)
    kp, kt, kh, ke = jax.random.split(root, 4)

    params = init_params(kp)
    text = jax.random.randint(kt, (B,), 0, VOCAB)                       # current target tokens
    hidden = jax.random.normal(kh, (B, H), jnp.float32)                 # decoder hidden state
    encoder_outputs = jax.random.normal(ke, (S, B, E2), jnp.float32)    # (src_len, batch, 2*enc_hid)
    lengths = jnp.array([8, 7, 6, 5, 4, 3, 2, 5], jnp.int32)
    mask = (jnp.arange(S)[None, :] < lengths[:, None]).astype(jnp.float32)  # (B, S)

    # one-time weight preprocessing + once-per-sequence input prep (amortized over steps)
    prep = jax.tree_util.tree_map(jax.block_until_ready, prepare_weights(params))
    enc_flat, addmask = prepare_sequence(encoder_outputs, mask)

    run = jax.jit(decoder_pallas)
    pred, h_new, attn = run(text, hidden, enc_flat, addmask, prep)
    jax.block_until_ready((pred, h_new, attn))

    ref_pred, ref_h, ref_attn = decoder_reference(text, hidden, encoder_outputs, mask, params)

    assert pred.shape == (B, OUT) and h_new.shape == (B, H) and attn.shape == (B, S)
    assert np.allclose(np.asarray(pred), ref_pred, rtol=2e-2, atol=2e-2)
    assert np.allclose(np.asarray(h_new), ref_h, rtol=2e-2, atol=2e-2)
    assert np.allclose(np.asarray(attn), ref_attn, rtol=2e-2, atol=2e-2)
    # attention rows must sum to 1 over valid positions
    assert np.allclose(np.asarray(attn).sum(axis=1), 1.0, atol=1e-4)

    print("KERNEL_OK")
</pallas_src>

<mosaic_0001>
module attributes {stable_mosaic.version = 11 : i64} {
  func.func @decoder_step_kernel(%arg0: memref<8xi32, #tpu.memory_space<smem>>, %arg1: memref<8x32xf32, #tpu.memory_space<vmem>>, %arg2: memref<64x128xbf16, #tpu.memory_space<vmem>>, %arg3: memref<8x8xf32, #tpu.memory_space<vmem>>, %arg4: memref<160x352xbf16, #tpu.memory_space<vmem>>, %arg5: memref<128x256xbf16, #tpu.memory_space<vmem>>, %arg6: memref<32x128xbf16, #tpu.memory_space<vmem>>, %arg7: memref<3x128xf32, #tpu.memory_space<vmem>>, %arg8: memref<8x256xf32, #tpu.memory_space<vmem>>) attributes {dimension_semantics = [], scalar_prefetch = 0 : i64, scratch_operands = 0 : i64, tpu.core_type = #tpu.core_type<tc>} {
    %c0 = arith.constant 0 : index
    %c0_0 = arith.constant 0 : index
    %0 = vector.load %arg1[%c0, %c0_0] : memref<8x32xf32, #tpu.memory_space<vmem>>, vector<8x32xf32>
    %1 = tpu.iota {dimensions = array<i32: 1>} : vector<1x128xi32>
    %c0_1 = arith.constant 0 : index
    %2 = memref.load %arg0[%c0_1] : memref<8xi32, #tpu.memory_space<smem>>
    %3 = vector.broadcast %2 : i32 to vector<1x128xi32>
    %4 = arith.cmpi eq, %1, %3 : vector<1x128xi32>
    %5 = arith.extui %4 : vector<1x128xi1> to vector<1x128xi32>
    %6 = arith.sitofp %5 : vector<1x128xi32> to vector<1x128xf32>
    %c1 = arith.constant 1 : index
    %7 = memref.load %arg0[%c1] : memref<8xi32, #tpu.memory_space<smem>>
    %8 = vector.broadcast %7 : i32 to vector<1x128xi32>
    %9 = arith.cmpi eq, %1, %8 : vector<1x128xi32>
    %10 = arith.extui %9 : vector<1x128xi1> to vector<1x128xi32>
    %11 = arith.sitofp %10 : vector<1x128xi32> to vector<1x128xf32>
    %c2 = arith.constant 2 : index
    %12 = memref.load %arg0[%c2] : memref<8xi32, #tpu.memory_space<smem>>
    %13 = vector.broadcast %12 : i32 to vector<1x128xi32>
    %14 = arith.cmpi eq, %1, %13 : vector<1x128xi32>
    %15 = arith.extui %14 : vector<1x128xi1> to vector<1x128xi32>
    %16 = arith.sitofp %15 : vector<1x128xi32> to vector<1x128xf32>
    %c3 = arith.constant 3 : index
    %17 = memref.load %arg0[%c3] : memref<8xi32, #tpu.memory_space<smem>>
    %18 = vector.broadcast %17 : i32 to vector<1x128xi32>
    %19 = arith.cmpi eq, %1, %18 : vector<1x128xi32>
    %20 = arith.extui %19 : vector<1x128xi1> to vector<1x128xi32>
    %21 = arith.sitofp %20 : vector<1x128xi32> to vector<1x128xf32>
    %c4 = arith.constant 4 : index
    %22 = memref.load %arg0[%c4] : memref<8xi32, #tpu.memory_space<smem>>
    %23 = vector.broadcast %22 : i32 to vector<1x128xi32>
    %24 = arith.cmpi eq, %1, %23 : vector<1x128xi32>
    %25 = arith.extui %24 : vector<1x128xi1> to vector<1x128xi32>
    %26 = arith.sitofp %25 : vector<1x128xi32> to vector<1x128xf32>
    %c5 = arith.constant 5 : index
    %27 = memref.load %arg0[%c5] : memref<8xi32, #tpu.memory_space<smem>>
    %28 = vector.broadcast %27 : i32 to vector<1x128xi32>
    %29 = arith.cmpi eq, %1, %28 : vector<1x128xi32>
    %30 = arith.extui %29 : vector<1x128xi1> to vector<1x128xi32>
    %31 = arith.sitofp %30 : vector<1x128xi32> to vector<1x128xf32>
    %c6 = arith.constant 6 : index
    %32 = memref.load %arg0[%c6] : memref<8xi32, #tpu.memory_space<smem>>
    %33 = vector.broadcast %32 : i32 to vector<1x128xi32>
    %34 = arith.cmpi eq, %1, %33 : vector<1x128xi32>
    %35 = arith.extui %34 : vector<1x128xi1> to vector<1x128xi32>
    %36 = arith.sitofp %35 : vector<1x128xi32> to vector<1x128xf32>
    %c7 = arith.constant 7 : index
    %37 = memref.load %arg0[%c7] : memref<8xi32, #tpu.memory_space<smem>>
    %38 = vector.broadcast %37 : i32 to vector<1x128xi32>
    %39 = arith.cmpi eq, %1, %38 : vector<1x128xi32>
    %40 = arith.extui %39 : vector<1x128xi1> to vector<1x128xi32>
    %41 = arith.sitofp %40 : vector<1x128xi32> to vector<1x128xf32>
    %42 = tpu.concatenate %6, %11, %16, %21, %26, %31, %36, %41 in 0 : vector<1x128xf32>, vector<1x128xf32>, vector<1x128xf32>, vector<1x128xf32>, vector<1x128xf32>, vector<1x128xf32>, vector<1x128xf32>, vector<1x128xf32> -> vector<8x128xf32>
    %43 = arith.truncf %0 : vector<8x32xf32> to vector<8x32xbf16>
    %44 = arith.truncf %42 : vector<8x128xf32> to vector<8x128xbf16>
    %45 = tpu.concatenate %43, %44 in 1 : vector<8x32xbf16>, vector<8x128xbf16> -> vector<8x160xbf16>
    %c0_2 = arith.constant 0 : index
    %c0_3 = arith.constant 0 : index
    %46 = vector.load %arg4[%c0_2, %c0_3] : memref<160x352xbf16, #tpu.memory_space<vmem>>, vector<160x352xbf16>
    %cst = arith.constant dense<0.000000e+00> : vector<8x352xf32>
    %47 = tpu.matmul %45, %46, %cst {dimension_numbers = #tpu.dot_dimension_numbers<[1], [0], [0], [1], [0, 0, 1, 1], [], []>} : vector<8x160xbf16>, vector<160x352xbf16>, vector<8x352xf32> -> vector<8x352xf32>
    %48 = vector.extract_strided_slice %47 {offsets = [0, 0], sizes = [8, 32], strides = [1, 1]} : vector<8x352xf32> to vector<8x32xf32>
    %49 = vector.extract_strided_slice %47 {offsets = [0, 32], sizes = [8, 96], strides = [1, 1]} : vector<8x352xf32> to vector<8x96xf32>
    %50 = vector.extract_strided_slice %47 {offsets = [0, 128], sizes = [8, 224], strides = [1, 1]} : vector<8x352xf32> to vector<8x224xf32>
    %c0_4 = arith.constant 0 : index
    %c0_5 = arith.constant 0 : index
    %51 = vector.load %arg2[%c0_4, %c0_5] : memref<64x128xbf16, #tpu.memory_space<vmem>>, vector<64x128xbf16>
    %c0_6 = arith.constant 0 : index
    %c0_7 = arith.constant 0 : index
    %52 = vector.load %arg5[%c0_6, %c0_7] : memref<128x256xbf16, #tpu.memory_space<vmem>>, vector<128x256xbf16>
    %cst_8 = arith.constant dense<0.000000e+00> : vector<64x256xf32>
    %53 = tpu.matmul %51, %52, %cst_8 {dimension_numbers = #tpu.dot_dimension_numbers<[1], [0], [0], [1], [0, 0, 1, 1], [], []>} : vector<64x128xbf16>, vector<128x256xbf16>, vector<64x256xf32> -> vector<64x256xf32>
    %c0_9 = arith.constant 0 : index
    %c0_10 = arith.constant 0 : index
    %54 = vector.load %arg7[%c0_9, %c0_10] : memref<3x128xf32, #tpu.memory_space<vmem>>, vector<1x32xf32>
    %c0_11 = arith.constant 0 : index
    %c32 = arith.constant 32 : index
    %55 = vector.load %arg7[%c0_11, %c32] : memref<3x128xf32, #tpu.memory_space<vmem>>, vector<1x32xf32>
    %c0_12 = arith.constant 0 : index
    %c64 = arith.constant 64 : index
    %56 = vector.load %arg7[%c0_12, %c64] : memref<3x128xf32, #tpu.memory_space<vmem>>, vector<1x32xf32>
    %c1_13 = arith.constant 1 : index
    %c0_14 = arith.constant 0 : index
    %57 = vector.load %arg7[%c1_13, %c0_14] : memref<3x128xf32, #tpu.memory_space<vmem>>, vector<1x96xf32>
    %c2_15 = arith.constant 2 : index
    %c0_16 = arith.constant 0 : index
    %58 = vector.load %arg7[%c2_15, %c0_16] : memref<3x128xf32, #tpu.memory_space<vmem>>, vector<1x128xf32>
    %59 = vector.extract_strided_slice %53 {offsets = [0, 0], sizes = [8, 256], strides = [1, 1]} : vector<64x256xf32> to vector<8x256xf32>
    %60 = vector.extract_strided_slice %59 {offsets = [0, 224], sizes = [8, 32], strides = [1, 1]} : vector<8x256xf32> to vector<8x32xf32>
    %61 = arith.addf %60, %48 : vector<8x32xf32>
    %62 = vector.broadcast %54 : vector<1x32xf32> to vector<8x32xf32>
    %63 = arith.addf %61, %62 : vector<8x32xf32>
    %64 = math.tanh %63 : vector<8x32xf32>
    %65 = vector.broadcast %55 : vector<1x32xf32> to vector<8x32xf32>
    %66 = arith.mulf %64, %65 : vector<8x32xf32>
    %cst_17 = arith.constant dense<0.000000e+00> : vector<8xf32>
    %67 = vector.multi_reduction <add>, %66, %cst_17 [1] : vector<8x32xf32> to vector<8xf32>
    %68 = vector.shape_cast %67 : vector<8xf32> to vector<8x1xf32>
    %69 = vector.extract_strided_slice %53 {offsets = [8, 0], sizes = [8, 256], strides = [1, 1]} : vector<64x256xf32> to vector<8x256xf32>
    %70 = vector.extract_strided_slice %69 {offsets = [0, 224], sizes = [8, 32], strides = [1, 1]} : vector<8x256xf32> to vector<8x32xf32>
    %71 = arith.addf %70, %48 : vector<8x32xf32>
    %72 = vector.broadcast %54 : vector<1x32xf32> to vector<8x32xf32>
    %73 = arith.addf %71, %72 : vector<8x32xf32>
    %74 = math.tanh %73 : vector<8x32xf32>
    %75 = vector.broadcast %55 : vector<1x32xf32> to vector<8x32xf32>
    %76 = arith.mulf %74, %75 : vector<8x32xf32>
    %cst_18 = arith.constant dense<0.000000e+00> : vector<8xf32>
    %77 = vector.multi_reduction <add>, %76, %cst_18 [1] : vector<8x32xf32> to vector<8xf32>
    %78 = vector.shape_cast %77 : vector<8xf32> to vector<8x1xf32>
    %79 = vector.extract_strided_slice %53 {offsets = [16, 0], sizes = [8, 256], strides = [1, 1]} : vector<64x256xf32> to vector<8x256xf32>
    %80 = vector.extract_strided_slice %79 {offsets = [0, 224], sizes = [8, 32], strides = [1, 1]} : vector<8x256xf32> to vector<8x32xf32>
    %81 = arith.addf %80, %48 : vector<8x32xf32>
    %82 = vector.broadcast %54 : vector<1x32xf32> to vector<8x32xf32>
    %83 = arith.addf %81, %82 : vector<8x32xf32>
    %84 = math.tanh %83 : vector<8x32xf32>
    %85 = vector.broadcast %55 : vector<1x32xf32> to vector<8x32xf32>
    %86 = arith.mulf %84, %85 : vector<8x32xf32>
    %cst_19 = arith.constant dense<0.000000e+00> : vector<8xf32>
    %87 = vector.multi_reduction <add>, %86, %cst_19 [1] : vector<8x32xf32> to vector<8xf32>
    %88 = vector.shape_cast %87 : vector<8xf32> to vector<8x1xf32>
    %89 = vector.extract_strided_slice %53 {offsets = [24, 0], sizes = [8, 256], strides = [1, 1]} : vector<64x256xf32> to vector<8x256xf32>
    %90 = vector.extract_strided_slice %89 {offsets = [0, 224], sizes = [8, 32], strides = [1, 1]} : vector<8x256xf32> to vector<8x32xf32>
    %91 = arith.addf %90, %48 : vector<8x32xf32>
    %92 = vector.broadcast %54 : vector<1x32xf32> to vector<8x32xf32>
    %93 = arith.addf %91, %92 : vector<8x32xf32>
    %94 = math.tanh %93 : vector<8x32xf32>
    %95 = vector.broadcast %55 : vector<1x32xf32> to vector<8x32xf32>
    %96 = arith.mulf %94, %95 : vector<8x32xf32>
    %cst_20 = arith.constant dense<0.000000e+00> : vector<8xf32>
    %97 = vector.multi_reduction <add>, %96, %cst_20 [1] : vector<8x32xf32> to vector<8xf32>
    %98 = vector.shape_cast %97 : vector<8xf32> to vector<8x1xf32>
    %99 = vector.extract_strided_slice %53 {offsets = [32, 0], sizes = [8, 256], strides = [1, 1]} : vector<64x256xf32> to vector<8x256xf32>
    %100 = vector.extract_strided_slice %99 {offsets = [0, 224], sizes = [8, 32], strides = [1, 1]} : vector<8x256xf32> to vector<8x32xf32>
    %101 = arith.addf %100, %48 : vector<8x32xf32>
    %102 = vector.broadcast %54 : vector<1x32xf32> to vector<8x32xf32>
    %103 = arith.addf %101, %102 : vector<8x32xf32>
    %104 = math.tanh %103 : vector<8x32xf32>
    %105 = vector.broadcast %55 : vector<1x32xf32> to vector<8x32xf32>
    %106 = arith.mulf %104, %105 : vector<8x32xf32>
    %cst_21 = arith.constant dense<0.000000e+00> : vector<8xf32>
    %107 = vector.multi_reduction <add>, %106, %cst_21 [1] : vector<8x32xf32> to vector<8xf32>
    %108 = vector.shape_cast %107 : vector<8xf32> to vector<8x1xf32>
    %109 = vector.extract_strided_slice %53 {offsets = [40, 0], sizes = [8, 256], strides = [1, 1]} : vector<64x256xf32> to vector<8x256xf32>
    %110 = vector.extract_strided_slice %109 {offsets = [0, 224], sizes = [8, 32], strides = [1, 1]} : vector<8x256xf32> to vector<8x32xf32>
    %111 = arith.addf %110, %48 : vector<8x32xf32>
    %112 = vector.broadcast %54 : vector<1x32xf32> to vector<8x32xf32>
    %113 = arith.addf %111, %112 : vector<8x32xf32>
    %114 = math.tanh %113 : vector<8x32xf32>
    %115 = vector.broadcast %55 : vector<1x32xf32> to vector<8x32xf32>
    %116 = arith.mulf %114, %115 : vector<8x32xf32>
    %cst_22 = arith.constant dense<0.000000e+00> : vector<8xf32>
    %117 = vector.multi_reduction <add>, %116, %cst_22 [1] : vector<8x32xf32> to vector<8xf32>
    %118 = vector.shape_cast %117 : vector<8xf32> to vector<8x1xf32>
    %119 = vector.extract_strided_slice %53 {offsets = [48, 0], sizes = [8, 256], strides = [1, 1]} : vector<64x256xf32> to vector<8x256xf32>
    %120 = vector.extract_strided_slice %119 {offsets = [0, 224], sizes = [8, 32], strides = [1, 1]} : vector<8x256xf32> to vector<8x32xf32>
    %121 = arith.addf %120, %48 : vector<8x32xf32>
    %122 = vector.broadcast %54 : vector<1x32xf32> to vector<8x32xf32>
    %123 = arith.addf %121, %122 : vector<8x32xf32>
    %124 = math.tanh %123 : vector<8x32xf32>
    %125 = vector.broadcast %55 : vector<1x32xf32> to vector<8x32xf32>
    %126 = arith.mulf %124, %125 : vector<8x32xf32>
    %cst_23 = arith.constant dense<0.000000e+00> : vector<8xf32>
    %127 = vector.multi_reduction <add>, %126, %cst_23 [1] : vector<8x32xf32> to vector<8xf32>
    %128 = vector.shape_cast %127 : vector<8xf32> to vector<8x1xf32>
    %129 = vector.extract_strided_slice %53 {offsets = [56, 0], sizes = [8, 256], strides = [1, 1]} : vector<64x256xf32> to vector<8x256xf32>
    %130 = vector.extract_strided_slice %129 {offsets = [0, 224], sizes = [8, 32], strides = [1, 1]} : vector<8x256xf32> to vector<8x32xf32>
    %131 = arith.addf %130, %48 : vector<8x32xf32>
    %132 = vector.broadcast %54 : vector<1x32xf32> to vector<8x32xf32>
    %133 = arith.addf %131, %132 : vector<8x32xf32>
    %134 = math.tanh %133 : vector<8x32xf32>
    %135 = vector.broadcast %55 : vector<1x32xf32> to vector<8x32xf32>
    %136 = arith.mulf %134, %135 : vector<8x32xf32>
    %cst_24 = arith.constant dense<0.000000e+00> : vector<8xf32>
    %137 = vector.multi_reduction <add>, %136, %cst_24 [1] : vector<8x32xf32> to vector<8xf32>
    %138 = vector.shape_cast %137 : vector<8xf32> to vector<8x1xf32>
    %139 = tpu.concatenate %68, %78, %88, %98, %108, %118, %128, %138 in 1 : vector<8x1xf32>, vector<8x1xf32>, vector<8x1xf32>, vector<8x1xf32>, vector<8x1xf32>, vector<8x1xf32>, vector<8x1xf32>, vector<8x1xf32> -> vector<8x8xf32>
    %c0_25 = arith.constant 0 : index
    %c0_26 = arith.constant 0 : index
    %140 = vector.load %arg3[%c0_25, %c0_26] : memref<8x8xf32, #tpu.memory_space<vmem>>, vector<8x8xf32>
    %141 = arith.addf %139, %140 : vector<8x8xf32>
    %cst_27 = arith.constant dense<0xFF800000> : vector<8xf32>
    %142 = vector.multi_reduction <maximumf>, %141, %cst_27 [1] : vector<8x8xf32> to vector<8xf32>
    %143 = vector.shape_cast %142 : vector<8xf32> to vector<8x1xf32>
    %144 = vector.broadcast %143 : vector<8x1xf32> to vector<8x8xf32>
    %145 = arith.subf %141, %144 : vector<8x8xf32>
    %146 = math.exp %145 : vector<8x8xf32>
    %cst_28 = arith.constant dense<0.000000e+00> : vector<8xf32>
    %147 = vector.multi_reduction <add>, %146, %cst_28 [1] : vector<8x8xf32> to vector<8xf32>
    %148 = vector.shape_cast %147 : vector<8xf32> to vector<8x1xf32>
    %149 = vector.broadcast %148 : vector<8x1xf32> to vector<8x8xf32>
    %150 = arith.divf %146, %149 : vector<8x8xf32>
    %cst_29 = arith.constant 0.000000e+00 : f32
    %151 = vector.broadcast %cst_29 : f32 to vector<8x224xf32>
    %152 = vector.extract_strided_slice %150 {offsets = [0, 0], sizes = [8, 1], strides = [1, 1]} : vector<8x8xf32> to vector<8x1xf32>
    %153 = vector.extract_strided_slice %53 {offsets = [0, 0], sizes = [8, 224], strides = [1, 1]} : vector<64x256xf32> to vector<8x224xf32>
    %154 = vector.broadcast %152 : vector<8x1xf32> to vector<8x224xf32>
    %155 = arith.mulf %154, %153 : vector<8x224xf32>
    %156 = arith.addf %151, %155 : vector<8x224xf32>
    %157 = vector.extract_strided_slice %150 {offsets = [0, 1], sizes = [8, 1], strides = [1, 1]} : vector<8x8xf32> to vector<8x1xf32>
    %158 = vector.extract_strided_slice %53 {offsets = [8, 0], sizes = [8, 224], strides = [1, 1]} : vector<64x256xf32> to vector<8x224xf32>
    %159 = vector.broadcast %157 : vector<8x1xf32> to vector<8x224xf32>
    %160 = arith.mulf %159, %158 : vector<8x224xf32>
    %161 = arith.addf %156, %160 : vector<8x224xf32>
    %162 = vector.extract_strided_slice %150 {offsets = [0, 2], sizes = [8, 1], strides = [1, 1]} : vector<8x8xf32> to vector<8x1xf32>
    %163 = vector.extract_strided_slice %53 {offsets = [16, 0], sizes = [8, 224], strides = [1, 1]} : vector<64x256xf32> to vector<8x224xf32>
    %164 = vector.broadcast %162 : vector<8x1xf32> to vector<8x224xf32>
    %165 = arith.mulf %164, %163 : vector<8x224xf32>
    %166 = arith.addf %161, %165 : vector<8x224xf32>
    %167 = vector.extract_strided_slice %150 {offsets = [0, 3], sizes = [8, 1], strides = [1, 1]} : vector<8x8xf32> to vector<8x1xf32>
    %168 = vector.extract_strided_slice %53 {offsets = [24, 0], sizes = [8, 224], strides = [1, 1]} : vector<64x256xf32> to vector<8x224xf32>
    %169 = vector.broadcast %167 : vector<8x1xf32> to vector<8x224xf32>
    %170 = arith.mulf %169, %168 : vector<8x224xf32>
    %171 = arith.addf %166, %170 : vector<8x224xf32>
    %172 = vector.extract_strided_slice %150 {offsets = [0, 4], sizes = [8, 1], strides = [1, 1]} : vector<8x8xf32> to vector<8x1xf32>
    %173 = vector.extract_strided_slice %53 {offsets = [32, 0], sizes = [8, 224], strides = [1, 1]} : vector<64x256xf32> to vector<8x224xf32>
    %174 = vector.broadcast %172 : vector<8x1xf32> to vector<8x224xf32>
    %175 = arith.mulf %174, %173 : vector<8x224xf32>
    %176 = arith.addf %171, %175 : vector<8x224xf32>
    %177 = vector.extract_strided_slice %150 {offsets = [0, 5], sizes = [8, 1], strides = [1, 1]} : vector<8x8xf32> to vector<8x1xf32>
    %178 = vector.extract_strided_slice %53 {offsets = [40, 0], sizes = [8, 224], strides = [1, 1]} : vector<64x256xf32> to vector<8x224xf32>
    %179 = vector.broadcast %177 : vector<8x1xf32> to vector<8x224xf32>
    %180 = arith.mulf %179, %178 : vector<8x224xf32>
    %181 = arith.addf %176, %180 : vector<8x224xf32>
    %182 = vector.extract_strided_slice %150 {offsets = [0, 6], sizes = [8, 1], strides = [1, 1]} : vector<8x8xf32> to vector<8x1xf32>
    %183 = vector.extract_strided_slice %53 {offsets = [48, 0], sizes = [8, 224], strides = [1, 1]} : vector<64x256xf32> to vector<8x224xf32>
    %184 = vector.broadcast %182 : vector<8x1xf32> to vector<8x224xf32>
    %185 = arith.mulf %184, %183 : vector<8x224xf32>
    %186 = arith.addf %181, %185 : vector<8x224xf32>
    %187 = vector.extract_strided_slice %150 {offsets = [0, 7], sizes = [8, 1], strides = [1, 1]} : vector<8x8xf32> to vector<8x1xf32>
    %188 = vector.extract_strided_slice %53 {offsets = [56, 0], sizes = [8, 224], strides = [1, 1]} : vector<64x256xf32> to vector<8x224xf32>
    %189 = vector.broadcast %187 : vector<8x1xf32> to vector<8x224xf32>
    %190 = arith.mulf %189, %188 : vector<8x224xf32>
    %191 = arith.addf %186, %190 : vector<8x224xf32>
    %192 = arith.addf %50, %191 : vector<8x224xf32>
    %193 = vector.extract_strided_slice %192 {offsets = [0, 128], sizes = [8, 96], strides = [1, 1]} : vector<8x224xf32> to vector<8x96xf32>
    %194 = vector.broadcast %57 : vector<1x96xf32> to vector<8x96xf32>
    %195 = arith.addf %193, %194 : vector<8x96xf32>
    %196 = vector.extract_strided_slice %195 {offsets = [0, 0], sizes = [8, 32], strides = [1, 1]} : vector<8x96xf32> to vector<8x32xf32>
    %197 = vector.extract_strided_slice %49 {offsets = [0, 0], sizes = [8, 32], strides = [1, 1]} : vector<8x96xf32> to vector<8x32xf32>
    %198 = arith.addf %196, %197 : vector<8x32xf32>
    %199 = arith.negf %198 : vector<8x32xf32>
    %200 = math.exp %199 : vector<8x32xf32>
    %cst_30 = arith.constant 1.000000e+00 : f32
    %201 = vector.broadcast %cst_30 : f32 to vector<8x32xf32>
    %202 = arith.addf %201, %200 : vector<8x32xf32>
    %203 = arith.divf %201, %202 : vector<8x32xf32>
    %204 = vector.extract_strided_slice %195 {offsets = [0, 32], sizes = [8, 32], strides = [1, 1]} : vector<8x96xf32> to vector<8x32xf32>
    %205 = vector.extract_strided_slice %49 {offsets = [0, 32], sizes = [8, 32], strides = [1, 1]} : vector<8x96xf32> to vector<8x32xf32>
    %206 = arith.addf %204, %205 : vector<8x32xf32>
    %207 = arith.negf %206 : vector<8x32xf32>
    %208 = math.exp %207 : vector<8x32xf32>
    %cst_31 = arith.constant 1.000000e+00 : f32
    %209 = vector.broadcast %cst_31 : f32 to vector<8x32xf32>
    %210 = arith.addf %209, %208 : vector<8x32xf32>
    %211 = arith.divf %209, %210 : vector<8x32xf32>
    %212 = vector.extract_strided_slice %195 {offsets = [0, 64], sizes = [8, 32], strides = [1, 1]} : vector<8x96xf32> to vector<8x32xf32>
    %213 = vector.extract_strided_slice %49 {offsets = [0, 64], sizes = [8, 32], strides = [1, 1]} : vector<8x96xf32> to vector<8x32xf32>
    %214 = vector.broadcast %56 : vector<1x32xf32> to vector<8x32xf32>
    %215 = arith.addf %213, %214 : vector<8x32xf32>
    %216 = arith.mulf %203, %215 : vector<8x32xf32>
    %217 = arith.addf %212, %216 : vector<8x32xf32>
    %218 = math.tanh %217 : vector<8x32xf32>
    %cst_32 = arith.constant 1.000000e+00 : f32
    %219 = vector.broadcast %cst_32 : f32 to vector<8x32xf32>
    %220 = arith.subf %219, %211 : vector<8x32xf32>
    %221 = arith.mulf %220, %218 : vector<8x32xf32>
    %222 = arith.mulf %211, %0 : vector<8x32xf32>
    %223 = arith.addf %221, %222 : vector<8x32xf32>
    %224 = arith.truncf %223 : vector<8x32xf32> to vector<8x32xbf16>
    %c0_33 = arith.constant 0 : index
    %c0_34 = arith.constant 0 : index
    %225 = vector.load %arg6[%c0_33, %c0_34] : memref<32x128xbf16, #tpu.memory_space<vmem>>, vector<32x128xbf16>
    %cst_35 = arith.constant dense<0.000000e+00> : vector<8x128xf32>
    %226 = tpu.matmul %224, %225, %cst_35 {dimension_numbers = #tpu.dot_dimension_numbers<[1], [0], [0], [1], [0, 0, 1, 1], [], []>} : vector<8x32xbf16>, vector<32x128xbf16>, vector<8x128xf32> -> vector<8x128xf32>
    %227 = vector.extract_strided_slice %192 {offsets = [0, 0], sizes = [8, 128], strides = [1, 1]} : vector<8x224xf32> to vector<8x128xf32>
    %228 = arith.addf %226, %227 : vector<8x128xf32>
    %229 = vector.broadcast %58 : vector<1x128xf32> to vector<8x128xf32>
    %230 = arith.addf %228, %229 : vector<8x128xf32>
    %cst_36 = arith.constant 0.000000e+00 : f32
    %231 = vector.broadcast %cst_36 : f32 to vector<8x88xf32>
    %232 = tpu.concatenate %230, %223, %150, %231 in 1 : vector<8x128xf32>, vector<8x32xf32>, vector<8x8xf32>, vector<8x88xf32> -> vector<8x256xf32>
    %c0_37 = arith.constant 0 : index
    %c0_38 = arith.constant 0 : index
    %233 = vector.load %arg8[%c0_37, %c0_38] : memref<8x256xf32, #tpu.memory_space<vmem>>, vector<8x256xf32>
    tpu.vector_store %arg8[%c0_37, %c0_38], %232 {strides = array<i32>} : memref<8x256xf32, #tpu.memory_space<vmem>>, vector<8x256xf32>,
    return
  }
}

</mosaic_0001>

<llo_original>
// kernel: decoder_pallas.1
$region0: #{decoder_pallas.1}
  #allocation0 [shape = 'u32[]', space=smem, size = 0x4, offset = 0x4, fixed_abs, tag = 'smem constant byte address 0x4 - core index']
  #allocation1 [shape = 'u32[144,128]{1,0:T(1,128)}', space=vmem, size = 0x12000, scoped, tag = 'internal scratch']
  %s0 = inlined_call_operand.hbm [shape: s32[8], index: 0, kind: input, shape index: {}]
  %s1 = inlined_call_operand.hbm [shape: f32[8,32], index: 1, kind: input, shape index: {}]
  %s2 = inlined_call_operand.hbm [shape: bf16[64,128], index: 2, kind: input, shape index: {}]
  %s3 = inlined_call_operand.vmem [shape: f32[8,8], index: 3, kind: input, shape index: {}]
  %s4 = inlined_call_operand.hbm [shape: bf16[160,352], index: 4, kind: input, shape index: {}]
  %s5 = inlined_call_operand.hbm [shape: bf16[128,256], index: 5, kind: input, shape index: {}]
  %s6 = inlined_call_operand.vmem [shape: bf16[32,128], index: 6, kind: input, shape index: {}]
  %s7 = inlined_call_operand.hbm [shape: f32[3,128], index: 7, kind: input, shape index: {}]
  %s8 = inlined_call_operand.vmem [shape: f32[8,256], index: 8, kind: output, shape index: {}]
  %s9 = sld [smem:[#allocation0]]
  $region66: #{decoder_pallas.1} parent=0
    _
  %s11 = ssub.s32 1, %s9
  %s12 = scalar_select 0, %s11, %s9
  $region1: #{decoder_pallas.1} parent=0
    #allocation2 [shape = 'u8[512]{0}', space=smem, size = 0x200, scoped, tag = 'input window, operand 0, single buffered']
    #allocation3 [shape = 's32[1]{0}', space=sflag, size = 0x4, scoped, tag = 'scoped memory for decoder_pallas.1']
    #allocation4 [shape = 's32[1]{0}', space=sflag, size = 0x4, scoped, tag = 'scoped memory for decoder_pallas.1']
    #allocation5 [shape = 'u8[4096]{0}', space=vmem, size = 0x1000, scoped, tag = 'input window, operand 1, single buffered']
    #allocation6 [shape = 'u8[16384]{0}', space=vmem, size = 0x4000, scoped, tag = 'input window, operand 2, single buffered']
    #allocation7 [shape = 's32[1]{0}', space=sflag, size = 0x4, scoped, tag = 'scoped memory for decoder_pallas.1']
    #allocation8 [shape = 'u8[122880]{0}', space=vmem, size = 0x1e000, scoped, tag = 'input window, operand 4, single buffered']
    #allocation9 [shape = 'u8[65536]{0}', space=vmem, size = 0x10000, scoped, tag = 'input window, operand 5, single buffered']
    #allocation10 [shape = 's32[1]{0}', space=sflag, size = 0x4, scoped, tag = 'scoped memory for decoder_pallas.1']
    #allocation11 [shape = 'u8[2048]{0}', space=vmem, size = 0x800, scoped, tag = 'input window, operand 7, single buffered']
    %13 = vsyncpa [#allocation4], 0
    %14 = vsyncpa [#allocation3], 0
    %15 = vsyncpa [#allocation7], 0
    %16 = vsyncpa [#allocation10], 0
    // Predicated region
    $region2: #{decoder_pallas.1} parent=1 // pred_check
      _
    $region3: #{decoder_pallas.1} parent=1 // pred_check_branch
      %18 = sbr.rel (0) target = $region5
    $region4: #{decoder_pallas.1} parent=1 // pred_region
      %s20 = ssub.s32 16, 16
      %21 = vsyncadd [#allocation4], %s20
      %24 = dma.hbm_to_smem %s0, 16, [#allocation2], [#allocation4]
    $region5: #{decoder_pallas.1} parent=1 // pred_fallthru
      _
    // Predicated region
    $region6: #{decoder_pallas.1} parent=1 // pred_check
      _
    $region7: #{decoder_pallas.1} parent=1 // pred_check_branch
      %26 = sbr.rel (0) target = $region9
    $region8: #{decoder_pallas.1} parent=1 // pred_region
      %s28 = ssub.s32 128, 128
      %29 = vsyncadd [#allocation3], %s28
      %s31 = sshll.u32 [#allocation5], 4
      %s32 = int_to_ptr.vmem [resolvable:$true] %s31
      %34 = dma.hbm_to_vmem [thread:$0]  %s1, 128, %s32, [#allocation3]
    $region9: #{decoder_pallas.1} parent=1 // pred_fallthru
      _
    // Predicated region
    $region10: #{decoder_pallas.1} parent=1 // pred_check
      _
    $region11: #{decoder_pallas.1} parent=1 // pred_check_branch
      %36 = sbr.rel (0) target = $region13
    $region12: #{decoder_pallas.1} parent=1 // pred_region
      %s38 = ssub.s32 512, 512
      %39 = vsyncadd [#allocation7], %s38
      %s40 = sshll.u32 [#allocation6], 4
      %s41 = int_to_ptr.vmem [resolvable:$true] %s40
      %46 = dma.hbm_to_vmem [thread:$0]  %s2, 512, %s41, [#allocation7], 64, 64, 4
    $region13: #{decoder_pallas.1} parent=1 // pred_fallthru
      _
    // Predicated region
    $region14: #{decoder_pallas.1} parent=1 // pred_check
      _
    $region15: #{decoder_pallas.1} parent=1 // pred_check_branch
      %48 = sbr.rel (0) target = $region17
    $region16: #{decoder_pallas.1} parent=1 // pred_region
      _
    $region17: #{decoder_pallas.1} parent=1 // pred_fallthru
      _
    // Predicated region
    $region18: #{decoder_pallas.1} parent=1 // pred_check
      _
    $region19: #{decoder_pallas.1} parent=1 // pred_check_branch
      %50 = sbr.rel (0) target = $region21
    $region20: #{decoder_pallas.1} parent=1 // pred_region
      %s52 = ssub.s32 3840, 3840
      %53 = vsyncadd [#allocation7], %s52
      %s54 = sshll.u32 [#allocation8], 4
      %s55 = int_to_ptr.vmem [resolvable:$true] %s54
      %60 = dma.hbm_to_vmem [thread:$0]  %s4, 3840, %s55, [#allocation7], 192, 192, 12
    $region21: #{decoder_pallas.1} parent=1 // pred_fallthru
      _
    // Predicated region
    $region22: #{decoder_pallas.1} parent=1 // pred_check
      _
    $region23: #{decoder_pallas.1} parent=1 // pred_check_branch
      %62 = sbr.rel (0) target = $region25
    $region24: #{decoder_pallas.1} parent=1 // pred_region
      %s64 = ssub.s32 2048, 2048
      %65 = vsyncadd [#allocation10], %s64
      %s66 = sshll.u32 [#allocation9], 4
      %s67 = int_to_ptr.vmem [resolvable:$true] %s66
      %72 = dma.hbm_to_vmem [thread:$0]  %s5, 2048, %s67, [#allocation10], 128, 128, 8
    $region25: #{decoder_pallas.1} parent=1 // pred_fallthru
      _
    // Predicated region
    $region26: #{decoder_pallas.1} parent=1 // pred_check
      _
    $region27: #{decoder_pallas.1} parent=1 // pred_check_branch
      %74 = sbr.rel (0) target = $region29
    $region28: #{decoder_pallas.1} parent=1 // pred_region
      _
    $region29: #{decoder_pallas.1} parent=1 // pred_fallthru
      _
    // Predicated region
    $region30: #{decoder_pallas.1} parent=1 // pred_check
      _
    $region31: #{decoder_pallas.1} parent=1 // pred_check_branch
      %76 = sbr.rel (0) target = $region33
    $region32: #{decoder_pallas.1} parent=1 // pred_region
      %s78 = ssub.s32 64, 64
      %79 = vsyncadd [#allocation10], %s78
      %s81 = sshll.u32 [#allocation11], 4
      %s82 = int_to_ptr.vmem [resolvable:$true] %s81
      %84 = dma.hbm_to_vmem [thread:$0]  %s7, 64, %s82, [#allocation10]
    $region33: #{decoder_pallas.1} parent=1 // pred_fallthru
      _
    // Predicated region
    $region34: #{decoder_pallas.1} parent=1 // pred_check
      _
    $region35: #{decoder_pallas.1} parent=1 // pred_check_branch
      %86 = sbr.rel (0) target = $region37
    $region36: #{decoder_pallas.1} parent=1 // pred_region
      %87 = dma.done [#allocation4], 16
    $region37: #{decoder_pallas.1} parent=1 // pred_fallthru
      _
    // Predicated region
    $region38: #{decoder_pallas.1} parent=1 // pred_check
      _
    $region39: #{decoder_pallas.1} parent=1 // pred_check_branch
      %89 = sbr.rel (0) target = $region41
    $region40: #{decoder_pallas.1} parent=1 // pred_region
      %90 = dma.done [#allocation3], 128
    $region41: #{decoder_pallas.1} parent=1 // pred_fallthru
      _
    // Predicated region
    $region42: #{decoder_pallas.1} parent=1 // pred_check
      _
    $region43: #{decoder_pallas.1} parent=1 // pred_check_branch
      %92 = sbr.rel (0) target = $region45
    $region44: #{decoder_pallas.1} parent=1 // pred_region
      %93 = dma.done [#allocation7], 512
    $region45: #{decoder_pallas.1} parent=1 // pred_fallthru
      _
    // Predicated region
    $region46: #{decoder_pallas.1} parent=1 // pred_check
      _
    $region47: #{decoder_pallas.1} parent=1 // pred_check_branch
      %95 = sbr.rel (0) target = $region49
    $region48: #{decoder_pallas.1} parent=1 // pred_region
      %96 = dma.done [#allocation7], 3840
    $region49: #{decoder_pallas.1} parent=1 // pred_fallthru
      _
    // Predicated region
    $region50: #{decoder_pallas.1} parent=1 // pred_check
      _
    $region51: #{decoder_pallas.1} parent=1 // pred_check_branch
      %98 = sbr.rel (0) target = $region53
    $region52: #{decoder_pallas.1} parent=1 // pred_region
      %99 = dma.done [#allocation10], 2048
    $region53: #{decoder_pallas.1} parent=1 // pred_fallthru
      _
    // Predicated region
    $region54: #{decoder_pallas.1} parent=1 // pred_check
      _
    $region55: #{decoder_pallas.1} parent=1 // pred_check_branch
      %101 = sbr.rel (0) target = $region57
    $region56: #{decoder_pallas.1} parent=1 // pred_region
      %102 = dma.done [#allocation10], 64
    $region57: #{decoder_pallas.1} parent=1 // pred_fallthru
      _
    %103 = sfence
    %v105 = vld [vmem:[#allocation5] sm:$0xff]
    %v106 = vlaneseq
    %v107 = vand.u32 %v106, 127
    %s108 = sld [smem:[#allocation2]]
    %v109 = vstv %s108
    %vm110 = vcmp.eq.s32.totalorder %v107, %v109
    %v111 = vsel %vm110, 1, 0
    %v112 = vcvt.s32.f32 %v111
    %s113 = sld [smem:[#allocation2 + $0x1]]
    %v114 = vstv %s113
    %vm115 = vcmp.eq.s32.totalorder %v107, %v114
    %v116 = vsel %vm115, 1, 0
    %v117 = vcvt.s32.f32 %v116
    %s118 = sld [smem:[#allocation2 + $0x2]]
    %v119 = vstv %s118
    %vm120 = vcmp.eq.s32.totalorder %v107, %v119
    %v121 = vsel %vm120, 1, 0
    %v122 = vcvt.s32.f32 %v121
    %s123 = sld [smem:[#allocation2 + $0x3]]
    %v124 = vstv %s123
    %vm125 = vcmp.eq.s32.totalorder %v107, %v124
    %v126 = vsel %vm125, 1, 0
    %v127 = vcvt.s32.f32 %v126
    %s128 = sld [smem:[#allocation2 + $0x4]]
    %v129 = vstv %s128
    %vm130 = vcmp.eq.s32.totalorder %v107, %v129
    %v131 = vsel %vm130, 1, 0
    %v132 = vcvt.s32.f32 %v131
    %s133 = sld [smem:[#allocation2 + $0x5]]
    %v134 = vstv %s133
    %vm135 = vcmp.eq.s32.totalorder %v107, %v134
    %v136 = vsel %vm135, 1, 0
    %v137 = vcvt.s32.f32 %v136
    %s138 = sld [smem:[#allocation2 + $0x6]]
    %v139 = vstv %s138
    %vm140 = vcmp.eq.s32.totalorder %v107, %v139
    %v141 = vsel %vm140, 1, 0
    %v142 = vcvt.s32.f32 %v141
    %s143 = sld [smem:[#allocation2 + $0x7]]
    %v144 = vstv %s143
    %vm145 = vcmp.eq.s32.totalorder %v107, %v144
    %v146 = vsel %vm145, 1, 0
    %v147 = vcvt.s32.f32 %v146
    %vm148 = vcmask 1040384
    %v149 = vsel %vm148, %v112, %v117
    %vm150 = vcmask 1041408
    %v151 = vsel %vm150, %v149, %v122
    %vm152 = vcmask 1042432
    %v153 = vsel %vm152, %v151, %v127
    %vm154 = vcmask 1043456
    %v155 = vsel %vm154, %v153, %v132
    %vm156 = vcmask 1044480
    %v157 = vsel %vm156, %v155, %v137
    %vm158 = vcmask 1045504
    %v159 = vsel %vm158, %v157, %v142
    %vm160 = vcmask 1046528
    %v161 = vsel %vm160, %v159, %v147
    %v162 = vpack.c.bf16 %v105, %v105
    %v163 = vpack.c.bf16 %v161, %v161
    %165 = vrot.lane.b32.xlu0 %v163, 32
    %v166 = vpop.permute.xlu0 %165
    %vm167 = vcmask 261120
    %v170 = vsel %vm167, %v162, %v166
    %v172 = vld [vmem:[#allocation8] sm:$0xff]
    %v173 = vld [vmem:[#allocation8 + $0x8] sm:$0xf]
    %v174 = vld [vmem:[#allocation8 + $0xc] sm:$0xff]
    %v175 = vld [vmem:[#allocation8 + $0x14] sm:$0xf]
    %v176 = vld [vmem:[#allocation8 + $0x18] sm:$0xff]
    %v177 = vld [vmem:[#allocation8 + $0x20] sm:$0xf]
    %v178 = vld [vmem:[#allocation8 + $0x24] sm:$0xff]
    %v179 = vld [vmem:[#allocation8 + $0x2c] sm:$0xf]
    %v180 = vld [vmem:[#allocation8 + $0x30] sm:$0xff]
    %v181 = vld [vmem:[#allocation8 + $0x38] sm:$0xf]
    %v182 = vld [vmem:[#allocation8 + $0x3c] sm:$0xff]
    %v183 = vld [vmem:[#allocation8 + $0x44] sm:$0xf]
    %v184 = vld [vmem:[#allocation8 + $0x48] sm:$0xff]
    %v185 = vld [vmem:[#allocation8 + $0x50] sm:$0xf]
    %v186 = vld [vmem:[#allocation8 + $0x54] sm:$0xff]
    %v187 = vld [vmem:[#allocation8 + $0x5c] sm:$0xf]
    %v188 = vld [vmem:[#allocation8 + $0x60] sm:$0xff]
    %v189 = vld [vmem:[#allocation8 + $0x68] sm:$0xf]
    %v190 = vld [vmem:[#allocation8 + $0x6c] sm:$0xff]
    %v191 = vld [vmem:[#allocation8 + $0x74] sm:$0xf]
    %v192 = vld [vmem:[#allocation8 + $0x78] sm:$0xff]
    %v193 = vld [vmem:[#allocation8 + $0x80] sm:$0xf]
    %v194 = vld [vmem:[#allocation8 + $0x84] sm:$0xff]
    %v195 = vld [vmem:[#allocation8 + $0x8c] sm:$0xf]
    %v196 = vld [vmem:[#allocation8 + $0x90] sm:$0xff]
    %v197 = vld [vmem:[#allocation8 + $0x98] sm:$0xf]
    %v198 = vld [vmem:[#allocation8 + $0x9c] sm:$0xff]
    %v199 = vld [vmem:[#allocation8 + $0xa4] sm:$0xf]
    %v200 = vld [vmem:[#allocation8 + $0xa8] sm:$0xff]
    %v201 = vld [vmem:[#allocation8 + $0xb0] sm:$0xf]
    %v202 = vld [vmem:[#allocation8 + $0xb4] sm:$0xff]
    %v203 = vld [vmem:[#allocation8 + $0xbc] sm:$0xf]
    %v204 = vld [vmem:[#allocation8 + $0xc0] sm:$0xff]
    %v205 = vld [vmem:[#allocation8 + $0xc8] sm:$0xf]
    %v206 = vld [vmem:[#allocation8 + $0xcc] sm:$0xff]
    %v207 = vld [vmem:[#allocation8 + $0xd4] sm:$0xf]
    %v208 = vld [vmem:[#allocation8 + $0xd8] sm:$0xff]
    %v209 = vld [vmem:[#allocation8 + $0xe0] sm:$0xf]
    %v210 = vld [vmem:[#allocation8 + $0xe4] sm:$0xff]
    %v211 = vld [vmem:[#allocation8 + $0xec] sm:$0xf]
    %v252 = vunpack.c.l.b16 %v172
    %v253 = vunpack.c.h.b16 %v172
    %v254 = vunpack.c.l.b16 %v173
    %v255 = vunpack.c.l.b16 %v174
    %v256 = vunpack.c.h.b16 %v174
    %v257 = vunpack.c.l.b16 %v175
    %v258 = vunpack.c.l.b16 %v176
    %v259 = vunpack.c.h.b16 %v176
    %v260 = vunpack.c.l.b16 %v177
    %v261 = vunpack.c.l.b16 %v178
    %v262 = vunpack.c.h.b16 %v178
    %v263 = vunpack.c.l.b16 %v179
    %v264 = vunpack.c.l.b16 %v180
    %v265 = vunpack.c.h.b16 %v180
    %v266 = vunpack.c.l.b16 %v181
    %v267 = vunpack.c.l.b16 %v182
    %v268 = vunpack.c.h.b16 %v182
    %v269 = vunpack.c.l.b16 %v183
    %v270 = vunpack.c.l.b16 %v184
    %v271 = vunpack.c.h.b16 %v184
    %v272 = vunpack.c.l.b16 %v185
    %v273 = vunpack.c.l.b16 %v186
    %v274 = vunpack.c.h.b16 %v186
    %v275 = vunpack.c.l.b16 %v187
    %v276 = vunpack.c.l.b16 %v188
    %v277 = vunpack.c.h.b16 %v188
    %v278 = vunpack.c.l.b16 %v189
    %v279 = vunpack.c.l.b16 %v190
    %v280 = vunpack.c.h.b16 %v190
    %v281 = vunpack.c.l.b16 %v191
    %v282 = vunpack.c.l.b16 %v192
    %v283 = vunpack.c.h.b16 %v192
    %v284 = vunpack.c.l.b16 %v193
    %v285 = vunpack.c.l.b16 %v194
    %v286 = vunpack.c.h.b16 %v194
    %v287 = vunpack.c.l.b16 %v195
    %v288 = vunpack.c.l.b16 %v196
    %v289 = vunpack.c.h.b16 %v196
    %v290 = vunpack.c.l.b16 %v197
    %v291 = vunpack.c.l.b16 %v198
    %v292 = vunpack.c.h.b16 %v198
    %v293 = vunpack.c.l.b16 %v199
    %v294 = vunpack.c.l.b16 %v200
    %v295 = vunpack.c.h.b16 %v200
    %v296 = vunpack.c.l.b16 %v201
    %v297 = vunpack.c.l.b16 %v202
    %v298 = vunpack.c.h.b16 %v202
    %v299 = vunpack.c.l.b16 %v203
    %v300 = vunpack.c.l.b16 %v204
    %v301 = vunpack.c.h.b16 %v204
    %v302 = vunpack.c.l.b16 %v205
    %v303 = vunpack.c.l.b16 %v206
    %v304 = vunpack.c.h.b16 %v206
    %v305 = vunpack.c.l.b16 %v207
    %v306 = vunpack.c.l.b16 %v208
    %v307 = vunpack.c.h.b16 %v208
    %v308 = vunpack.c.l.b16 %v209
    %v309 = vunpack.c.l.b16 %v210
    %v310 = vunpack.c.h.b16 %v210
    %v311 = vunpack.c.l.b16 %v211
    %v312 = vpack.c.b16 %v255, %v252
    %v313 = vpack.c.b16 %v256, %v253
    %v314 = vpack.c.b16 %v257, %v254
    %v315 = vpack.c.b16 %v261, %v258
    %v316 = vpack.c.b16 %v262, %v259
    %v317 = vpack.c.b16 %v263, %v260
    %v318 = vpack.c.b16 %v267, %v264
    %v319 = vpack.c.b16 %v268, %v265
    %v320 = vpack.c.b16 %v269, %v266
    %v321 = vpack.c.b16 %v273, %v270
    %v322 = vpack.c.b16 %v274, %v271
    %v323 = vpack.c.b16 %v275, %v272
    %v324 = vpack.c.b16 %v279, %v276
    %v325 = vpack.c.b16 %v280, %v277
    %v326 = vpack.c.b16 %v281, %v278
    %v327 = vpack.c.b16 %v285, %v282
    %v328 = vpack.c.b16 %v286, %v283
    %v329 = vpack.c.b16 %v287, %v284
    %v330 = vpack.c.b16 %v291, %v288
    %v331 = vpack.c.b16 %v292, %v289
    %v332 = vpack.c.b16 %v293, %v290
    %v333 = vpack.c.b16 %v297, %v294
    %v334 = vpack.c.b16 %v298, %v295
    %v335 = vpack.c.b16 %v299, %v296
    %v336 = vpack.c.b16 %v303, %v300
    %v337 = vpack.c.b16 %v304, %v301
    %v338 = vpack.c.b16 %v305, %v302
    %v339 = vpack.c.b16 %v309, %v306
    %v340 = vpack.c.b16 %v310, %v307
    %v341 = vpack.c.b16 %v311, %v308
    %v372 = vsel %vm167, %v166, 0
    %374 = vmatprep.subr.bf16.mxu0 %v313
    %375 = vmatpush1.bf16.msra.mxu0 %v312
    %376 = vmatprep.subr.bf16.mxu0 %v316
    %377 = vmatpush1.bf16.msra.mxu0 %v315
    %378 = vmatprep.subr.bf16.mxu0 %v319
    %379 = vmatpush1.bf16.msra.mxu0 %v318
    %380 = vmatprep.subr.bf16.mxu0 %v322
    %381 = vmatpush1.bf16.msra.mxu0 %v321
    %382 = vmatprep.subr.bf16.mxu0 %v325
    %383 = vmatpush1.bf16.msra.mxu0 %v324
    %384 = vmatprep.subr.bf16.mxu0 %v328
    %385 = vmatpush1.bf16.msra.mxu0 %v327
    %386 = vmatprep.subr.bf16.mxu0 %v331
    %387 = vmatpush1.bf16.msra.mxu0 %v330
    %388 = vmatprep.subr.bf16.mxu0 %v334
    %389 = vmatpush1.bf16.msra.mxu0 %v333
    %390 = vmatprep.subr.bf16.mxu0 %v337
    %391 = vmatpush1.bf16.msra.mxu0 %v336
    %392 = vmatprep.subr.bf16.mxu0 %v340
    %393 = vmatpush1.bf16.msra.mxu0 %v339
    %394 = vmatprep.subr.bf16.mxu0 0
    %395 = vmatpush1.bf16.msra.mxu0 0
    %396 = vmatprep.subr.bf16.mxu0 0
    %397 = vmatpush1.bf16.msra.mxu0 0
    %398 = vmatprep.subr.bf16.mxu0 0
    %399 = vmatpush1.bf16.msra.mxu0 0
    %400 = vmatprep.subr.bf16.mxu0 0
    %401 = vmatpush1.bf16.msra.mxu0 0
    %402 = vmatprep.subr.bf16.mxu0 0
    %403 = vmatpush1.bf16.msra.mxu0 0
    %404 = vmatprep.subr.bf16.mxu0 0
    %405 = vmatpush1.bf16.msra.mxu0 0
    %406 = vmatprep.mubr.bf16.mxu0 %v372
    %407 = vmatmul.mubr.bf16.gmra.mrb[0].mxu0 %v170
    %v408 = vpop.f32.mrb[0].mxu0
    %v409 = vadd.f32 0.0, %v408
    %v410 = vpop.f32.mrb[0].mxu0
    %v411 = vadd.f32 0.0, %v410
    %v412 = vpop.f32.mrb[0].mxu0
    %v413 = vpop.f32.mrb[0].mxu0
    %414 = vdwg.mxu0
    %415 = vmatprep.subr.bf16.mxu0 0
    %416 = vmatpush1.bf16.msra.mxu0 %v314
    %417 = vmatprep.subr.bf16.mxu0 0
    %418 = vmatpush1.bf16.msra.mxu0 %v317
    %419 = vmatprep.subr.bf16.mxu0 0
    %420 = vmatpush1.bf16.msra.mxu0 %v320
    %421 = vmatprep.subr.bf16.mxu0 0
    %422 = vmatpush1.bf16.msra.mxu0 %v323
    %423 = vmatprep.subr.bf16.mxu0 0
    %424 = vmatpush1.bf16.msra.mxu0 %v326
    %425 = vmatprep.subr.bf16.mxu0 0
    %426 = vmatpush1.bf16.msra.mxu0 %v329
    %427 = vmatprep.subr.bf16.mxu0 0
    %428 = vmatpush1.bf16.msra.mxu0 %v332
    %429 = vmatprep.subr.bf16.mxu0 0
    %430 = vmatpush1.bf16.msra.mxu0 %v335
    %431 = vmatprep.subr.bf16.mxu0 0
    %432 = vmatpush1.bf16.msra.mxu0 %v338
    %433 = vmatprep.subr.bf16.mxu0 0
    %434 = vmatpush1.bf16.msra.mxu0 %v341
    %435 = vmatprep.subr.bf16.mxu0 0
    %436 = vmatpush1.bf16.msra.mxu0 0
    %437 = vmatprep.subr.bf16.mxu0 0
    %438 = vmatpush1.bf16.msra.mxu0 0
    %439 = vmatprep.subr.bf16.mxu0 0
    %440 = vmatpush1.bf16.msra.mxu0 0
    %441 = vmatprep.subr.bf16.mxu0 0
    %442 = vmatpush1.bf16.msra.mxu0 0
    %443 = vmatprep.subr.bf16.mxu0 0
    %444 = vmatpush1.bf16.msra.mxu0 0
    %445 = vmatprep.subr.bf16.mxu0 0
    %446 = vmatpush1.bf16.msra.mxu0 0
    %447 = vmatprep.mubr.bf16.mxu0 %v372
    %448 = vmatmul.mubr.bf16.gmra.mrb[0].mxu0 %v170
    %v449 = vpop.f32.mrb[0].mxu0
    %v450 = vadd.f32 0.0, %v449
    %v451 = vpop.f32.mrb[0].mxu0
    %v452 = vpop.f32.mrb[0].mxu0
    %v453 = vpop.f32.mrb[0].mxu0
    %454 = vdwg.mxu0
    %v455 = vld [vmem:[#allocation6] sm:$0xf]
    %v456 = vld [vmem:[#allocation6 + $0x4] sm:$0xf]
    %v457 = vld [vmem:[#allocation6 + $0x8] sm:$0xf]
    %v458 = vld [vmem:[#allocation6 + $0xc] sm:$0xf]
    %v459 = vld [vmem:[#allocation6 + $0x10] sm:$0xf]
    %v460 = vld [vmem:[#allocation6 + $0x14] sm:$0xf]
    %v461 = vld [vmem:[#allocation6 + $0x18] sm:$0xf]
    %v462 = vld [vmem:[#allocation6 + $0x1c] sm:$0xf]
    %v463 = vld [vmem:[#allocation9] sm:$0xff]
    %v464 = vld [vmem:[#allocation9 + $0x8] sm:$0xff]
    %v465 = vld [vmem:[#allocation9 + $0x10] sm:$0xff]
    %v466 = vld [vmem:[#allocation9 + $0x18] sm:$0xff]
    %v467 = vld [vmem:[#allocation9 + $0x20] sm:$0xff]
    %v468 = vld [vmem:[#allocation9 + $0x28] sm:$0xff]
    %v469 = vld [vmem:[#allocation9 + $0x30] sm:$0xff]
    %v470 = vld [vmem:[#allocation9 + $0x38] sm:$0xff]
    %v471 = vld [vmem:[#allocation9 + $0x40] sm:$0xff]
    %v472 = vld [vmem:[#allocation9 + $0x48] sm:$0xff]
    %v473 = vld [vmem:[#allocation9 + $0x50] sm:$0xff]
    %v474 = vld [vmem:[#allocation9 + $0x58] sm:$0xff]
    %v475 = vld [vmem:[#allocation9 + $0x60] sm:$0xff]
    %v476 = vld [vmem:[#allocation9 + $0x68] sm:$0xff]
    %v477 = vld [vmem:[#allocation9 + $0x70] sm:$0xff]
    %v478 = vld [vmem:[#allocation9 + $0x78] sm:$0xff]
    %v487 = vunpack.c.l.b16 %v455
    %v488 = vunpack.c.l.b16 %v456
    %v489 = vunpack.c.l.b16 %v457
    %v490 = vunpack.c.l.b16 %v458
    %v491 = vunpack.c.l.b16 %v459
    %v492 = vunpack.c.l.b16 %v460
    %v493 = vunpack.c.l.b16 %v461
    %v494 = vunpack.c.l.b16 %v462
    %v495 = vpack.c.b16 %v488, %v487
    %v496 = vpack.c.b16 %v490, %v489
    %v497 = vpack.c.b16 %v492, %v491
    %v498 = vpack.c.b16 %v494, %v493
    %v519 = vunpack.c.l.b16 %v463
    %v520 = vunpack.c.h.b16 %v463
    %v521 = vunpack.c.l.b16 %v464
    %v522 = vunpack.c.h.b16 %v464
    %v523 = vunpack.c.l.b16 %v465
    %v524 = vunpack.c.h.b16 %v465
    %v525 = vunpack.c.l.b16 %v466
    %v526 = vunpack.c.h.b16 %v466
    %v527 = vunpack.c.l.b16 %v467
    %v528 = vunpack.c.h.b16 %v467
    %v529 = vunpack.c.l.b16 %v468
    %v530 = vunpack.c.h.b16 %v468
    %v531 = vunpack.c.l.b16 %v469
    %v532 = vunpack.c.h.b16 %v469
    %v533 = vunpack.c.l.b16 %v470
    %v534 = vunpack.c.h.b16 %v470
    %v535 = vunpack.c.l.b16 %v471
    %v536 = vunpack.c.h.b16 %v471
    %v537 = vunpack.c.l.b16 %v472
    %v538 = vunpack.c.h.b16 %v472
    %v539 = vunpack.c.l.b16 %v473
    %v540 = vunpack.c.h.b16 %v473
    %v541 = vunpack.c.l.b16 %v474
    %v542 = vunpack.c.h.b16 %v474
    %v543 = vunpack.c.l.b16 %v475
    %v544 = vunpack.c.h.b16 %v475
    %v545 = vunpack.c.l.b16 %v476
    %v546 = vunpack.c.h.b16 %v476
    %v547 = vunpack.c.l.b16 %v477
    %v548 = vunpack.c.h.b16 %v477
    %v549 = vunpack.c.l.b16 %v478
    %v550 = vunpack.c.h.b16 %v478
    %v551 = vpack.c.b16 %v521, %v519
    %v552 = vpack.c.b16 %v522, %v520
    %v553 = vpack.c.b16 %v525, %v523
    %v554 = vpack.c.b16 %v526, %v524
    %v555 = vpack.c.b16 %v529, %v527
    %v556 = vpack.c.b16 %v530, %v528
    %v557 = vpack.c.b16 %v533, %v531
    %v558 = vpack.c.b16 %v534, %v532
    %v559 = vpack.c.b16 %v537, %v535
    %v560 = vpack.c.b16 %v538, %v536
    %v561 = vpack.c.b16 %v541, %v539
    %v562 = vpack.c.b16 %v542, %v540
    %v563 = vpack.c.b16 %v545, %v543
    %v564 = vpack.c.b16 %v546, %v544
    %v565 = vpack.c.b16 %v549, %v547
    %v566 = vpack.c.b16 %v550, %v548
    %583 = vmatprep.subr.bf16.mxu0 %v552
    %584 = vmatpush1.bf16.msra.mxu0 %v551
    %585 = vmatprep.subr.bf16.mxu0 %v554
    %586 = vmatpush1.bf16.msra.mxu0 %v553
    %587 = vmatprep.subr.bf16.mxu0 %v556
    %588 = vmatpush1.bf16.msra.mxu0 %v555
    %589 = vmatprep.subr.bf16.mxu0 %v558
    %590 = vmatpush1.bf16.msra.mxu0 %v557
    %591 = vmatprep.subr.bf16.mxu0 %v560
    %592 = vmatpush1.bf16.msra.mxu0 %v559
    %593 = vmatprep.subr.bf16.mxu0 %v562
    %594 = vmatpush1.bf16.msra.mxu0 %v561
    %595 = vmatprep.subr.bf16.mxu0 %v564
    %596 = vmatpush1.bf16.msra.mxu0 %v563
    %597 = vmatprep.subr.bf16.mxu0 %v566
    %598 = vmatpush1.bf16.msra.mxu0 %v565
    %599 = vmatprep.subr.bf16.mxu0 0
    %600 = vmatpush1.bf16.msra.mxu0 0
    %601 = vmatprep.subr.bf16.mxu0 0
    %602 = vmatpush1.bf16.msra.mxu0 0
    %603 = vmatprep.subr.bf16.mxu0 0
    %604 = vmatpush1.bf16.msra.mxu0 0
    %605 = vmatprep.subr.bf16.mxu0 0
    %606 = vmatpush1.bf16.msra.mxu0 0
    %607 = vmatprep.subr.bf16.mxu0 0
    %608 = vmatpush1.bf16.msra.mxu0 0
    %609 = vmatprep.subr.bf16.mxu0 0
    %610 = vmatpush1.bf16.msra.mxu0 0
    %611 = vmatprep.subr.bf16.mxu0 0
    %612 = vmatpush1.bf16.msra.mxu0 0
    %613 = vmatprep.subr.bf16.mxu0 0
    %614 = vmatpush1.bf16.msra.mxu0 0
    %615 = vmatprep.mubr.bf16.mxu0 0
    %616 = vmatmul.mubr.bf16.gmra.mrb[0].mxu0 %v495
    %v617 = vpop.f32.mrb[0].mxu0
    %v618 = vadd.f32 0.0, %v617
    %v619 = vpop.f32.mrb[0].mxu0
    %v620 = vadd.f32 0.0, %v619
    %v621 = vpop.f32.mrb[0].mxu0
    %v622 = vadd.f32 0.0, %v621
    %v623 = vpop.f32.mrb[0].mxu0
    %v624 = vadd.f32 0.0, %v623
    %625 = vmatprep.mubr.bf16.mxu0 0
    %626 = vmatmul.mubr.bf16.gmra.mrb[0].mxu0 %v496
    %v627 = vpop.f32.mrb[0].mxu0
    %v628 = vadd.f32 0.0, %v627
    %v629 = vpop.f32.mrb[0].mxu0
    %v630 = vadd.f32 0.0, %v629
    %v631 = vpop.f32.mrb[0].mxu0
    %v632 = vadd.f32 0.0, %v631
    %v633 = vpop.f32.mrb[0].mxu0
    %v634 = vadd.f32 0.0, %v633
    %635 = vmatprep.mubr.bf16.mxu0 0
    %636 = vmatmul.mubr.bf16.gmra.mrb[0].mxu0 %v497
    %v637 = vpop.f32.mrb[0].mxu0
    %v638 = vadd.f32 0.0, %v637
    %v639 = vpop.f32.mrb[0].mxu0
    %v640 = vadd.f32 0.0, %v639
    %v641 = vpop.f32.mrb[0].mxu0
    %v642 = vadd.f32 0.0, %v641
    %v643 = vpop.f32.mrb[0].mxu0
    %v644 = vadd.f32 0.0, %v643
    %645 = vmatprep.mubr.bf16.mxu0 0
    %646 = vmatmul.mubr.bf16.gmra.mrb[0].mxu0 %v498
    %v647 = vpop.f32.mrb[0].mxu0
    %v648 = vadd.f32 0.0, %v647
    %v649 = vpop.f32.mrb[0].mxu0
    %v650 = vadd.f32 0.0, %v649
    %v651 = vpop.f32.mrb[0].mxu0
    %v652 = vadd.f32 0.0, %v651
    %v653 = vpop.f32.mrb[0].mxu0
    %v654 = vadd.f32 0.0, %v653
    %655 = vdwg.mxu0
    %v656 = vld [vmem:[#allocation11] sm:$0x1]
    %v657 = vld [vmem:[#allocation11 + $0x1] sm:$0x1]
    %v658 = vld [vmem:[#allocation11 + $0x2] sm:$0x1]
    %660 = vrot.lane.b32.xlu0 %v409, 96
    %v661 = vpop.permute.xlu0 %660
    %v663 = vadd.f32 %v620, %v661
    %v664 = vlaneseq
    %v665 = vshrl.u32 %v664, 7
    %v666 = vsub.s32 0, %v665
    %v667 = vrot.slane %v656, %v666
    %669 = vrot.lane.b32.xlu0 %v667, 96
    %v670 = vpop.permute.xlu0 %669
    %v672 = vadd.f32 %v663, %v670
    %v673 = vtanh.pop %v672
    %674 = vrot.lane.b32.xlu0 %v667, 64
    %v675 = vpop.permute.xlu0 %674
    %v677 = vmul.f32 %v673, %v675
    %679 = vrot.lane.b32.xlu0 %v677, 32
    %v680 = vpop.permute.xlu0 %679
    %v682 = vsel %vm167, %v680, 0.0
    %683 = vadd.xlane.f32.xlu0 %v682
    %v684 = vpop.xlane.xlu0 %683
    %v685 = vadd.f32 %v624, %v661
    %v686 = vadd.f32 %v685, %v670
    %v687 = vtanh.pop %v686
    %v688 = vmul.f32 %v687, %v675
    %690 = vrot.lane.b32.xlu0 %v688, 32
    %v691 = vpop.permute.xlu0 %690
    %v693 = vsel %vm167, %v691, 0.0
    %694 = vadd.xlane.f32.xlu0 %v693
    %v695 = vpop.xlane.xlu0 %694
    %v696 = vadd.f32 %v630, %v661
    %v697 = vadd.f32 %v696, %v670
    %v698 = vtanh.pop %v697
    %v699 = vmul.f32 %v698, %v675
    %701 = vrot.lane.b32.xlu0 %v699, 32
    %v702 = vpop.permute.xlu0 %701
    %v704 = vsel %vm167, %v702, 0.0
    %705 = vadd.xlane.f32.xlu0 %v704
    %v706 = vpop.xlane.xlu0 %705
    %v707 = vadd.f32 %v634, %v661
    %v708 = vadd.f32 %v707, %v670
    %v709 = vtanh.pop %v708
    %v710 = vmul.f32 %v709, %v675
    %712 = vrot.lane.b32.xlu0 %v710, 32
    %v713 = vpop.permute.xlu0 %712
    %v715 = vsel %vm167, %v713, 0.0
    %716 = vadd.xlane.f32.xlu0 %v715
    %v717 = vpop.xlane.xlu0 %716
    %v718 = vadd.f32 %v640, %v661
    %v719 = vadd.f32 %v718, %v670
    %v720 = vtanh.pop %v719
    %v721 = vmul.f32 %v720, %v675
    %723 = vrot.lane.b32.xlu0 %v721, 32
    %v724 = vpop.permute.xlu0 %723
    %v726 = vsel %vm167, %v724, 0.0
    %727 = vadd.xlane.f32.xlu0 %v726
    %v728 = vpop.xlane.xlu0 %727
    %v729 = vadd.f32 %v644, %v661
    %v730 = vadd.f32 %v729, %v670
    %v731 = vtanh.pop %v730
    %v732 = vmul.f32 %v731, %v675
    %734 = vrot.lane.b32.xlu0 %v732, 32
    %v735 = vpop.permute.xlu0 %734
    %v737 = vsel %vm167, %v735, 0.0
    %738 = vadd.xlane.f32.xlu0 %v737
    %v739 = vpop.xlane.xlu0 %738
    %v740 = vadd.f32 %v650, %v661
    %v741 = vadd.f32 %v740, %v670
    %v742 = vtanh.pop %v741
    %v743 = vmul.f32 %v742, %v675
    %745 = vrot.lane.b32.xlu0 %v743, 32
    %v746 = vpop.permute.xlu0 %745
    %v748 = vsel %vm167, %v746, 0.0
    %749 = vadd.xlane.f32.xlu0 %v748
    %v750 = vpop.xlane.xlu0 %749
    %v751 = vadd.f32 %v654, %v661
    %v752 = vadd.f32 %v751, %v670
    %v753 = vtanh.pop %v752
    %v754 = vmul.f32 %v753, %v675
    %756 = vrot.lane.b32.xlu0 %v754, 32
    %v757 = vpop.permute.xlu0 %756
    %v759 = vsel %vm167, %v757, 0.0
    %760 = vadd.xlane.f32.xlu0 %v759
    %v761 = vpop.xlane.xlu0 %760
    %vm762 = vcmask 7168
    %v763 = vsel %vm762, %v684, %v695
    %vm764 = vcmask 15360
    %v765 = vsel %vm764, %v763, %v706
    %vm766 = vcmask 23552
    %v767 = vsel %vm766, %v765, %v717
    %vm768 = vcmask 31744
    %v769 = vsel %vm768, %v767, %v728
    %vm770 = vcmask 39936
    %v771 = vsel %vm770, %v769, %v739
    %vm772 = vcmask 48128
    %v773 = vsel %vm772, %v771, %v750
    %vm774 = vcmask 56320
    %v775 = vsel %vm774, %v773, %v761
    %v776 = vld [vmem:[%s3] sm:$0xff]
    %v777 = vadd.f32 %v775, %v776
    %vm778 = vcmask 64512
    %v779 = vsel %vm778, %v777, -inf
    %780 = vmax.xlane.f32.xlu0 %v779
    %v781 = vpop.xlane.xlu0 %780
    %v782 = vsub.f32 %v777, %v781
    %v783 = vmul.f32 %v782, 1.442695
    %v784 = vpow.pop %v783
    %v785 = vsel %vm778, %v784, 0.0
    %786 = vadd.xlane.f32.xlu0 %v785
    %v787 = vpop.xlane.xlu0 %786
    %v788 = vrcp.pop %v787
    %v789 = vmul.f32 %v784, %v788
    %791 = vset.pattern.permute.xlu0 0
    %792 = vperm.xlu0 %791, %v789
    %v793 = vpop.permute.xlu0 %792
    %v795 = vmul.f32 %v793, %v618
    %v796 = vmul.f32 %v793, %v620
    %v797 = vadd.f32 %v795, 0.0
    %v798 = vadd.f32 %v796, 0.0
    %799 = vset.pattern.permute.xlu0 1
    %800 = vperm.xlu0 %799, %v789
    %v801 = vpop.permute.xlu0 %800
    %v803 = vmul.f32 %v801, %v622
    %v804 = vmul.f32 %v801, %v624
    %v805 = vadd.f32 %v797, %v803
    %v806 = vadd.f32 %v798, %v804
    %807 = vset.pattern.permute.xlu0 2
    %808 = vperm.xlu0 %807, %v789
    %v809 = vpop.permute.xlu0 %808
    %v811 = vmul.f32 %v809, %v628
    %v812 = vmul.f32 %v809, %v630
    %v813 = vadd.f32 %v805, %v811
    %v814 = vadd.f32 %v806, %v812
    %815 = vset.pattern.permute.xlu0 3
    %816 = vperm.xlu0 %815, %v789
    %v817 = vpop.permute.xlu0 %816
    %v819 = vmul.f32 %v817, %v632
    %v820 = vmul.f32 %v817, %v634
    %v821 = vadd.f32 %v813, %v819
    %v822 = vadd.f32 %v814, %v820
    %823 = vset.pattern.permute.xlu0 4
    %824 = vperm.xlu0 %823, %v789
    %v825 = vpop.permute.xlu0 %824
    %v827 = vmul.f32 %v825, %v638
    %v828 = vmul.f32 %v825, %v640
    %v829 = vadd.f32 %v821, %v827
    %v830 = vadd.f32 %v822, %v828
    %831 = vset.pattern.permute.xlu0 5
    %832 = vperm.xlu0 %831, %v789
    %v833 = vpop.permute.xlu0 %832
    %v835 = vmul.f32 %v833, %v642
    %v836 = vmul.f32 %v833, %v644
    %v837 = vadd.f32 %v829, %v835
    %v838 = vadd.f32 %v830, %v836
    %839 = vset.pattern.permute.xlu0 6
    %840 = vperm.xlu0 %839, %v789
    %v841 = vpop.permute.xlu0 %840
    %v843 = vmul.f32 %v841, %v648
    %v844 = vmul.f32 %v841, %v650
    %v845 = vadd.f32 %v837, %v843
    %v846 = vadd.f32 %v838, %v844
    %847 = vset.pattern.permute.xlu0 7
    %848 = vperm.xlu0 %847, %v789
    %v849 = vpop.permute.xlu0 %848
    %v851 = vmul.f32 %v849, %v652
    %v852 = vmul.f32 %v849, %v654
    %v853 = vadd.f32 %v845, %v851
    %v854 = vadd.f32 %v846, %v852
    %v855 = vadd.f32 %v411, %v853
    %v856 = vadd.f32 %v450, %v854
    %v857 = vlaneseq
    %v858 = vshrl.u32 %v857, 7
    %v859 = vsub.s32 0, %v858
    %v860 = vrot.slane %v657, %v859
    %v861 = vadd.f32 %v856, %v860
    %v862 = vadd.f32 %v861, %v661
    %v863 = vxor.u32 %v862, 2147483648
    %v864 = vmul.f32 %v863, 1.442695
    %v865 = vpow.pop %v864
    %v866 = vadd.f32 %v865, 1.0
    %v867 = vrcp.pop %v866
    %v868 = vmul.f32 1.0, %v867
    %869 = vrot.lane.b32.xlu0 %v667, 32
    %v870 = vpop.permute.xlu0 %869
    %v872 = vadd.f32 %v409, %v870
    %874 = vrot.lane.b32.xlu0 %v872, 32
    %v875 = vpop.permute.xlu0 %874
    %v877 = vmul.f32 %v868, %v875
    %879 = vrot.lane.b32.xlu0 %v877, 64
    %v880 = vpop.permute.xlu0 %879
    %v882 = vadd.f32 %v861, %v880
    %v883 = vtanh.pop %v882
    %v884 = vsub.f32 1.0, %v868
    %886 = vrot.lane.b32.xlu0 %v883, 96
    %v887 = vpop.permute.xlu0 %886
    %v889 = vmul.f32 %v884, %v887
    %891 = vrot.lane.b32.xlu0 %v105, 32
    %v892 = vpop.permute.xlu0 %891
    %v894 = vmul.f32 %v868, %v892
    %v895 = vadd.f32 %v889, %v894
    %v896 = vpack.c.bf16 %v895, %v895
    %v897 = vld [vmem:[%s6] sm:$0xf]
    %v898 = vld [vmem:[%s6 + $0x4] sm:$0xf]
    %v899 = vld [vmem:[%s6 + $0x8] sm:$0xf]
    %v900 = vld [vmem:[%s6 + $0xc] sm:$0xf]
    %902 = vrot.lane.b32.xlu0 %v896, 96
    %v903 = vpop.permute.xlu0 %902
    %v908 = vunpack.c.l.b16 %v897
    %v909 = vunpack.c.l.b16 %v898
    %v910 = vunpack.c.l.b16 %v899
    %v911 = vunpack.c.l.b16 %v900
    %v912 = vpack.c.b16 %v909, %v908
    %v913 = vpack.c.b16 %v911, %v910
    %v917 = vsel %vm167, %v903, 0
    %919 = vmatprep.subr.bf16.mxu0 0
    %920 = vmatpush1.bf16.msra.mxu0 %v912
    %921 = vmatprep.subr.bf16.mxu0 0
    %922 = vmatpush1.bf16.msra.mxu0 %v913
    %923 = vmatprep.subr.bf16.mxu0 0
    %924 = vmatpush1.bf16.msra.mxu0 0
    %925 = vmatprep.subr.bf16.mxu0 0
    %926 = vmatpush1.bf16.msra.mxu0 0
    %927 = vmatprep.subr.bf16.mxu0 0
    %928 = vmatpush1.bf16.msra.mxu0 0
    %929 = vmatprep.subr.bf16.mxu0 0
    %930 = vmatpush1.bf16.msra.mxu0 0
    %931 = vmatprep.subr.bf16.mxu0 0
    %932 = vmatpush1.bf16.msra.mxu0 0
    %933 = vmatprep.subr.bf16.mxu0 0
    %934 = vmatpush1.bf16.msra.mxu0 0
    %935 = vmatprep.subr.bf16.mxu0 0
    %936 = vmatpush1.bf16.msra.mxu0 0
    %937 = vmatprep.subr.bf16.mxu0 0
    %938 = vmatpush1.bf16.msra.mxu0 0
    %939 = vmatprep.subr.bf16.mxu0 0
    %940 = vmatpush1.bf16.msra.mxu0 0
    %941 = vmatprep.subr.bf16.mxu0 0
    %942 = vmatpush1.bf16.msra.mxu0 0
    %943 = vmatprep.subr.bf16.mxu0 0
    %944 = vmatpush1.bf16.msra.mxu0 0
    %945 = vmatprep.subr.bf16.mxu0 0
    %946 = vmatpush1.bf16.msra.mxu0 0
    %947 = vmatprep.subr.bf16.mxu0 0
    %948 = vmatpush1.bf16.msra.mxu0 0
    %949 = vmatprep.subr.bf16.mxu0 0
    %950 = vmatpush1.bf16.msra.mxu0 0
    %951 = vmatprep.mubr.bf16.mxu0 0
    %952 = vmatmul.mubr.bf16.gmra.mrb[0].mxu0 %v917
    %v953 = vpop.f32.mrb[0].mxu0
    %v954 = vadd.f32 %v855, %v953
    %v955 = vpop.f32.mrb[0].mxu0
    %v956 = vpop.f32.mrb[0].mxu0
    %v957 = vpop.f32.mrb[0].mxu0
    %958 = vdwg.mxu0
    %v959 = vlaneseq
    %v960 = vshrl.u32 %v959, 7
    %v961 = vsub.s32 0, %v960
    %v962 = vrot.slane %v658, %v961
    %v963 = vadd.f32 %v954, %v962
    %965 = vrot.lane.b32.xlu0 %v895, 96
    %v966 = vpop.permute.xlu0 %965
    %968 = vrot.lane.b32.xlu0 %v789, 32
    %v969 = vpop.permute.xlu0 %968
    %v971 = vsel %vm167, %v966, %v969
    %vm972 = vcmask 326656
    %v973 = vsel %vm972, %v971, 0.0
    %974 = vst [vmem:[%s8] sm:$0xff] %v963
    %975 = vst [vmem:[%s8 + $0x8] sm:$0xff] %v973
    // Predicated region
    $region58: #{decoder_pallas.1} parent=1 // pred_check
      _
    $region59: #{decoder_pallas.1} parent=1 // pred_check_branch
      %977 = sbr.rel (0) target = $region61
    $region60: #{decoder_pallas.1} parent=1 // pred_region
      _
    $region61: #{decoder_pallas.1} parent=1 // pred_fallthru
      _
    // Predicated region
    $region62: #{decoder_pallas.1} parent=1 // pred_check
      _
    $region63: #{decoder_pallas.1} parent=1 // pred_check_branch
      %979 = sbr.rel (0) target = $region65
    $region64: #{decoder_pallas.1} parent=1 // pred_region
      _
    $region65: #{decoder_pallas.1} parent=1 // pred_fallthru
      _
    %980 = vsyncpa [#allocation3], 1
    %981 = vsyncpa [#allocation7], 1
    %982 = vsyncpa [#allocation10], 1
    %983 = vsyncpa [#allocation4], 1

</llo_original>
